<compile_context>
chip_gen: v5e
topology: v5e:2x2
jax: 0.10.0
libtpu: 0.0.40
codegen_flags: <defaults>
</compile_context>

<pallas_src>
import jax
import jax.numpy as jnp
from jax import lax
from jax.experimental import pallas as pl
from jax.experimental.pallas import tpu as pltpu


def _focus_kernel(x00_ref, x10_ref, x01_ref, x11_ref, w_ref, b_ref, o_ref):
    """One (batch, spatial-tile) grid cell: folded 1x1 conv + BN bias + SiLU.

    x??_ref : (1, C1, TS)  space-to-depth quadrant (channels on sublanes,
                           TS flattened output-spatial positions on lanes).
    w_ref   : (4, C2, C1)  per-quadrant 1x1 weights with BN scale folded in.
    b_ref   : (C2, 1)      folded BN bias.
    o_ref   : (1, C2, TS)
    """
    acc = jnp.dot(w_ref[0], x00_ref[0], preferred_element_type=jnp.float32)
    acc = acc + jnp.dot(w_ref[1], x10_ref[0], preferred_element_type=jnp.float32)
    acc = acc + jnp.dot(w_ref[2], x01_ref[0], preferred_element_type=jnp.float32)
    acc = acc + jnp.dot(w_ref[3], x11_ref[0], preferred_element_type=jnp.float32)
    y = acc + b_ref[...]                                    # per-channel bias (lane bcast)
    o_ref[0] = (y * jax.nn.sigmoid(y)).astype(o_ref.dtype)  # SiLU in f32, narrow at store


def _pick_spatial_tile(hw, n_batch, per_lane_bytes, max_lanes, vmem_budget_bytes):
    """Largest lane-dense spatial tile under the VMEM budget.

    Prefers the largest multiple-of-128 divisor of hw (no ragged edge, unmasked
    stores); keeps at least 2 total grid steps when possible so both v7x
    TensorCores get work.
    """
    cap = max(128, min(max_lanes, vmem_budget_bytes // per_lane_bytes))

    if hw % 128 == 0:
        def largest_div(limit):
            limit = min(limit, hw)
            for k in range(limit // 128, 0, -1):
                if hw % (128 * k) == 0:
                    return 128 * k
            return None

        ts = largest_div(cap) or 128
        if n_batch * (hw // ts) < 2:              # single-step grid -> split spatially
            ts2 = largest_div(min(cap, hw // 2))
            if ts2 is not None:
                ts = ts2
        return ts

    if hw <= cap:
        return hw                                  # small: one full-extent block
    # Ragged fallback: 128-multiple tile that does not divide hw; the compute is
    # purely per-lane so Pallas' masked edge handling keeps it correct.
    return (cap // 128) * 128


def focus_pallas(x_nchw, params, *, out_dtype=None,
                 max_tile_lanes=32768, vmem_budget_bytes=20 * 1024 * 1024):
    """x_nchw: (N, C1, H, W), H and W even.  Returns (N, C2, H//2, W//2)."""
    w, g, be, m, v = params                  # w: (C2, 4*C1, 1, 1); BN params: (C2,)
    eps = 1e-3
    N, C1, H, W = x_nchw.shape
    assert H % 2 == 0 and W % 2 == 0, "Focus requires even H and W"
    C2 = w.shape[0]
    assert w.shape[1] == 4 * C1
    H2, W2 = H // 2, W // 2
    HW = H2 * W2
    out_dtype = x_nchw.dtype if out_dtype is None else jnp.dtype(out_dtype)

    # Fold BN (eval mode) into the conv weight / a per-channel bias.
    scale = g / jnp.sqrt(v + eps)                                  # (C2,)
    bias = (be - m * scale).reshape(C2, 1).astype(jnp.float32)     # (C2, 1)
    w_mat = (w[:, :, 0, 0] * scale[:, None]).astype(jnp.float32)   # (C2, 4*C1)
    # Split into the 4 torch.cat groups: (4, C2, C1), g order = (0,0),(1,0),(0,1),(1,1).
    w_stack = w_mat.reshape(C2, 4, C1).transpose(1, 0, 2)

    # Space-to-depth quadrants as strided-slice views (no concat); with
    # allow_input_fusion XLA may fuse these into the kernel's input DMAs.
    def quad(hp, wp):
        return x_nchw[:, :, hp::2, wp::2].reshape(N, C1, HW)
    x00, x10, x01, x11 = quad(0, 0), quad(1, 0), quad(0, 1), quad(1, 1)

    in_b = x_nchw.dtype.itemsize
    out_b = out_dtype.itemsize
    per_lane = 2 * (4 * C1 * in_b + C2 * out_b)        # double-buffered in + out bytes / lane
    ts = _pick_spatial_tile(HW, N, per_lane, max_tile_lanes, vmem_budget_bytes)
    n_sp = pl.cdiv(HW, ts)

    in_spec = pl.BlockSpec((1, C1, ts), lambda n, s: (n, 0, s))
    out = pl.pallas_call(
        _focus_kernel,
        out_shape=jax.ShapeDtypeStruct((N, C2, HW), out_dtype),
        grid_spec=pltpu.PrefetchScalarGridSpec(
            num_scalar_prefetch=0,
            grid=(N, n_sp),
            in_specs=[
                in_spec, in_spec, in_spec, in_spec,
                pl.BlockSpec((4, C2, C1), lambda n, s: (0, 0, 0)),
                pl.BlockSpec((C2, 1), lambda n, s: (0, 0)),
            ],
            out_specs=pl.BlockSpec((1, C2, ts), lambda n, s: (n, 0, s)),
        ),
        compiler_params=pltpu.CompilerParams(
            dimension_semantics=("parallel", "parallel"),
            vmem_limit_bytes=32 * 1024 * 1024,
            allow_input_fusion=[True, True, True, True, False, False],
        ),
    )(x00, x10, x01, x11, w_stack, bias)

    return out.reshape(N, C2, H2, W2)


def focus_reference(x_nchw, params):
    """Pure-JAX reference matching PyTorch eval-mode Focus (k=1) semantics."""
    w, g, be, m, v = params
    eps = 1e-3
    xs = jnp.concatenate(
        [x_nchw[:, :, ::2, ::2], x_nchw[:, :, 1::2, ::2],
         x_nchw[:, :, ::2, 1::2], x_nchw[:, :, 1::2, 1::2]], axis=1)
    y = lax.conv_general_dilated(
        xs, w, window_strides=(1, 1), padding=[(0, 0), (0, 0)],
        dimension_numbers=("NCHW", "OIHW", "NCHW"),
        precision=lax.Precision.HIGHEST)
    scale = g / jnp.sqrt(v + eps)
    bias = be - m * scale
    y = y * scale[None, :, None, None] + bias[None, :, None, None]
    return y * jax.nn.sigmoid(y)


def make_params(key, c1, c2):
    ks = jax.random.split(key, 5)
    w = jax.random.normal(ks[0], (c2, 4 * c1, 1, 1), jnp.float32) * 0.2
    g = 1.0 + 0.1 * jax.random.normal(ks[1], (c2,), jnp.float32)
    be = 0.05 * jax.random.normal(ks[2], (c2,), jnp.float32)
    m = 0.05 * jax.random.normal(ks[3], (c2,), jnp.float32)
    v = 1.0 + 0.2 * jax.random.uniform(ks[4], (c2,), jnp.float32)
    return (w, g, be, m, v)


if __name__ == "__main__":
    key = jax.random.PRNGKey(0)
    k_x, k_p = jax.random.split(key)

    N, C1, H, W = 2, 4, 16, 16            # Focus(c1=4, c2=8, k=1)
    C2 = 8
    x = jax.random.normal(k_x, (N, C1, H, W), jnp.float32)
    params = make_params(k_p, C1, C2)

    out = jax.jit(focus_pallas)(x, params)
    out = jax.block_until_ready(out)

    ref = jax.jit(focus_reference)(x, params)
    ref = jax.block_until_ready(ref)

    assert out.shape == (N, C2, H // 2, W // 2)
    assert jnp.allclose(out, ref, atol=1e-4, rtol=1e-4), (
        f"max abs err = {float(jnp.max(jnp.abs(out - ref)))}")
    print("KERNEL_OK")
</pallas_src>

<mosaic_0001>
module attributes {stable_mosaic.version = 11 : i64} {
  func.func @_focus_kernel(%arg0: i32, %arg1: i32, %arg2: memref<1x4x64xf32, #tpu.memory_space<vmem>>, %arg3: memref<1x4x64xf32, #tpu.memory_space<vmem>>, %arg4: memref<1x4x64xf32, #tpu.memory_space<vmem>>, %arg5: memref<1x4x64xf32, #tpu.memory_space<vmem>>, %arg6: memref<4x8x4xf32, #tpu.memory_space<vmem>>, %arg7: memref<8x1xf32, #tpu.memory_space<vmem>>, %arg8: memref<1x8x64xf32, #tpu.memory_space<vmem>>) attributes {dimension_semantics = [#tpu.dimension_semantics<parallel>, #tpu.dimension_semantics<parallel>], iteration_bounds = array<i64: 2, 1>, scalar_prefetch = 0 : i64, scratch_operands = 0 : i64, tpu.core_type = #tpu.core_type<tc>, window_params = [{transform_indices = @transform_0, window_bounds = array<i64: 1, 4, 64>}, {transform_indices = @transform_1, window_bounds = array<i64: 1, 4, 64>}, {transform_indices = @transform_2, window_bounds = array<i64: 1, 4, 64>}, {transform_indices = @transform_3, window_bounds = array<i64: 1, 4, 64>}, {pipeline_mode = #tpu.pipeline_mode<synchronous>, transform_indices = @transform_4, window_bounds = array<i64: 4, 8, 4>}, {pipeline_mode = #tpu.pipeline_mode<synchronous>, transform_indices = @transform_5, window_bounds = array<i64: 8, 1>}, {transform_indices = @transform_6, window_bounds = array<i64: 1, 8, 64>}]} {
    %c0 = arith.constant 0 : index
    %c0_0 = arith.constant 0 : index
    %c0_1 = arith.constant 0 : index
    %0 = vector.load %arg6[%c0, %c0_0, %c0_1] : memref<4x8x4xf32, #tpu.memory_space<vmem>>, vector<1x8x4xf32>
    %1 = vector.shape_cast %0 : vector<1x8x4xf32> to vector<8x4xf32>
    %c0_2 = arith.constant 0 : index
    %c0_3 = arith.constant 0 : index
    %c0_4 = arith.constant 0 : index
    %2 = vector.load %arg2[%c0_2, %c0_3, %c0_4] : memref<1x4x64xf32, #tpu.memory_space<vmem>>, vector<1x4x64xf32>
    %3 = vector.shape_cast %2 : vector<1x4x64xf32> to vector<4x64xf32>
    %cst = arith.constant dense<0.000000e+00> : vector<8x64xf32>
    %4 = tpu.matmul %1, %3, %cst {dimension_numbers = #tpu.dot_dimension_numbers<[1], [0], [0], [1], [0, 0, 1, 1], [], []>} : vector<8x4xf32>, vector<4x64xf32>, vector<8x64xf32> -> vector<8x64xf32>
    %c1 = arith.constant 1 : index
    %c0_5 = arith.constant 0 : index
    %c0_6 = arith.constant 0 : index
    %5 = vector.load %arg6[%c1, %c0_5, %c0_6] : memref<4x8x4xf32, #tpu.memory_space<vmem>>, vector<1x8x4xf32>
    %6 = vector.shape_cast %5 : vector<1x8x4xf32> to vector<8x4xf32>
    %c0_7 = arith.constant 0 : index
    %c0_8 = arith.constant 0 : index
    %c0_9 = arith.constant 0 : index
    %7 = vector.load %arg3[%c0_7, %c0_8, %c0_9] : memref<1x4x64xf32, #tpu.memory_space<vmem>>, vector<1x4x64xf32>
    %8 = vector.shape_cast %7 : vector<1x4x64xf32> to vector<4x64xf32>
    %cst_10 = arith.constant dense<0.000000e+00> : vector<8x64xf32>
    %9 = tpu.matmul %6, %8, %cst_10 {dimension_numbers = #tpu.dot_dimension_numbers<[1], [0], [0], [1], [0, 0, 1, 1], [], []>} : vector<8x4xf32>, vector<4x64xf32>, vector<8x64xf32> -> vector<8x64xf32>
    %10 = arith.addf %4, %9 : vector<8x64xf32>
    %c2 = arith.constant 2 : index
    %c0_11 = arith.constant 0 : index
    %c0_12 = arith.constant 0 : index
    %11 = vector.load %arg6[%c2, %c0_11, %c0_12] : memref<4x8x4xf32, #tpu.memory_space<vmem>>, vector<1x8x4xf32>
    %12 = vector.shape_cast %11 : vector<1x8x4xf32> to vector<8x4xf32>
    %c0_13 = arith.constant 0 : index
    %c0_14 = arith.constant 0 : index
    %c0_15 = arith.constant 0 : index
    %13 = vector.load %arg4[%c0_13, %c0_14, %c0_15] : memref<1x4x64xf32, #tpu.memory_space<vmem>>, vector<1x4x64xf32>
    %14 = vector.shape_cast %13 : vector<1x4x64xf32> to vector<4x64xf32>
    %cst_16 = arith.constant dense<0.000000e+00> : vector<8x64xf32>
    %15 = tpu.matmul %12, %14, %cst_16 {dimension_numbers = #tpu.dot_dimension_numbers<[1], [0], [0], [1], [0, 0, 1, 1], [], []>} : vector<8x4xf32>, vector<4x64xf32>, vector<8x64xf32> -> vector<8x64xf32>
    %16 = arith.addf %10, %15 : vector<8x64xf32>
    %c3 = arith.constant 3 : index
    %c0_17 = arith.constant 0 : index
    %c0_18 = arith.constant 0 : index
    %17 = vector.load %arg6[%c3, %c0_17, %c0_18] : memref<4x8x4xf32, #tpu.memory_space<vmem>>, vector<1x8x4xf32>
    %18 = vector.shape_cast %17 : vector<1x8x4xf32> to vector<8x4xf32>
    %c0_19 = arith.constant 0 : index
    %c0_20 = arith.constant 0 : index
    %c0_21 = arith.constant 0 : index
    %19 = vector.load %arg5[%c0_19, %c0_20, %c0_21] : memref<1x4x64xf32, #tpu.memory_space<vmem>>, vector<1x4x64xf32>
    %20 = vector.shape_cast %19 : vector<1x4x64xf32> to vector<4x64xf32>
    %cst_22 = arith.constant dense<0.000000e+00> : vector<8x64xf32>
    %21 = tpu.matmul %18, %20, %cst_22 {dimension_numbers = #tpu.dot_dimension_numbers<[1], [0], [0], [1], [0, 0, 1, 1], [], []>} : vector<8x4xf32>, vector<4x64xf32>, vector<8x64xf32> -> vector<8x64xf32>
    %22 = arith.addf %16, %21 : vector<8x64xf32>
    %c0_23 = arith.constant 0 : index
    %c0_24 = arith.constant 0 : index
    %23 = vector.load %arg7[%c0_23, %c0_24] : memref<8x1xf32, #tpu.memory_space<vmem>>, vector<8x1xf32>
    %24 = vector.broadcast %23 : vector<8x1xf32> to vector<8x64xf32>
    %25 = arith.addf %22, %24 : vector<8x64xf32>
    %26 = arith.negf %25 : vector<8x64xf32>
    %27 = math.exp %26 : vector<8x64xf32>
    %cst_25 = arith.constant 1.000000e+00 : f32
    %28 = vector.broadcast %cst_25 : f32 to vector<8x64xf32>
    %29 = arith.addf %28, %27 : vector<8x64xf32>
    %30 = arith.divf %28, %29 : vector<8x64xf32>
    %31 = arith.mulf %25, %30 : vector<8x64xf32>
    %c0_26 = arith.constant 0 : index
    %c0_27 = arith.constant 0 : index
    %c0_28 = arith.constant 0 : index
    %32 = vector.load %arg8[%c0_26, %c0_27, %c0_28] : memref<1x8x64xf32, #tpu.memory_space<vmem>>, vector<1x8x64xf32>
    %33 = vector.shape_cast %32 : vector<1x8x64xf32> to vector<8x64xf32>
    %34 = vector.shape_cast %31 : vector<8x64xf32> to vector<1x8x64xf32>
    tpu.vector_store %arg8[%c0_26, %c0_27, %c0_28], %34 {strides = array<i32>} : memref<1x8x64xf32, #tpu.memory_space<vmem>>, vector<1x8x64xf32>,
    return
  }
  func.func @transform_0(%arg0: i32, %arg1: i32) -> (i32, i32, i32) {
    %c0_i32 = arith.constant 0 : i32
    %c0_i32_0 = arith.constant 0 : i32
    return %arg0, %c0_i32, %arg1 : i32, i32, i32
  }
  func.func @transform_1(%arg0: i32, %arg1: i32) -> (i32, i32, i32) {
    %c0_i32 = arith.constant 0 : i32
    %c0_i32_0 = arith.constant 0 : i32
    return %arg0, %c0_i32, %arg1 : i32, i32, i32
  }
  func.func @transform_2(%arg0: i32, %arg1: i32) -> (i32, i32, i32) {
    %c0_i32 = arith.constant 0 : i32
    %c0_i32_0 = arith.constant 0 : i32
    return %arg0, %c0_i32, %arg1 : i32, i32, i32
  }
  func.func @transform_3(%arg0: i32, %arg1: i32) -> (i32, i32, i32) {
    %c0_i32 = arith.constant 0 : i32
    %c0_i32_0 = arith.constant 0 : i32
    return %arg0, %c0_i32, %arg1 : i32, i32, i32
  }
  func.func @transform_4(%arg0: i32, %arg1: i32) -> (i32, i32, i32) {
    %c0_i32 = arith.constant 0 : i32
    %c0_i32_0 = arith.constant 0 : i32
    %c0_i32_1 = arith.constant 0 : i32
    %c0_i32_2 = arith.constant 0 : i32
    return %c0_i32, %c0_i32_0, %c0_i32_1 : i32, i32, i32
  }
  func.func @transform_5(%arg0: i32, %arg1: i32) -> (i32, i32) {
    %c0_i32 = arith.constant 0 : i32
    %c0_i32_0 = arith.constant 0 : i32
    %c0_i32_1 = arith.constant 0 : i32
    return %c0_i32, %c0_i32_0 : i32, i32
  }
  func.func @transform_6(%arg0: i32, %arg1: i32) -> (i32, i32, i32) {
    %c0_i32 = arith.constant 0 : i32
    %c0_i32_0 = arith.constant 0 : i32
    return %arg0, %c0_i32, %arg1 : i32, i32, i32
  }
}

</mosaic_0001>

<llo_original>
// kernel: focus_pallas.1
$region0: #{focus_pallas.1}
  #allocation0 [shape = 'u32[]', space=smem, size = 0x4, offset = 0x4, fixed_abs, tag = 'smem constant byte address 0x4 - core index']
  #allocation1 [shape = 'u32[72,128]{1,0:T(1,128)}', space=vmem, size = 0x9000, scoped, tag = 'internal scratch']
  %s0 = inlined_call_operand.vmem [shape: f32[2,4,64], index: 0, kind: input, shape index: {}]
  %s1 = inlined_call_operand.vmem [shape: f32[2,4,64], index: 1, kind: input, shape index: {}]
  %s2 = inlined_call_operand.vmem [shape: f32[2,4,64], index: 2, kind: input, shape index: {}]
  %s3 = inlined_call_operand.vmem [shape: f32[2,4,64], index: 3, kind: input, shape index: {}]
  %s4 = inlined_call_operand.vmem [shape: f32[4,8,4], index: 4, kind: input, shape index: {}]
  %s5 = inlined_call_operand.vmem [shape: f32[8,1], index: 5, kind: input, shape index: {}]
  %s6 = inlined_call_operand.vmem [shape: f32[2,8,64], index: 6, kind: output, shape index: {}]
  %s7 = sld [smem:[#allocation0]]
  $region57: #{focus_pallas.1} parent=0
    _
  %s9 = ssub.s32 1, %s7
  %s10 = scalar_select 0, %s9, %s7
  loop: start=0, step=1, limit=4
  $region2: #{focus_pallas.1} parent=0 // loop_pre_header
    _
  $region3: #{focus_pallas.1} parent=0 // loop_header
    %s12 = sphi 0, %s16
    %p13 = scmp.ge.s32.totalorder %s12, 4
    %s19 = sphi 0, %s31
    %s20 = sphi 0, %s27
    %s21 = sphi 0, %s19
    %s22 = sphi 0, %s20
    %s23 = sphi 0, %s21
    %s24 = sphi 0, %s22
    %s36 = sphi 0, %s38
    %s39 = sphi 0, %s36
    %s40 = sphi 0, %s39
    %s56 = sphi 0, %s40
    %s64 = sphi 0, %s66
    %s67 = sphi 0, %s64
    %s68 = sphi 0, %s67
    %s84 = sphi 0, %s68
    %s92 = sphi 0, %s94
    %s95 = sphi 0, %s92
    %s96 = sphi 0, %s95
    %s112 = sphi 0, %s96
    %s120 = sphi 0, %s122
    %s123 = sphi 0, %s120
    %s124 = sphi 0, %s123
    %s140 = sphi 0, %s124
    %s144 = sphi 0, %s144
    %s146 = sphi 0, %s144
    %s147 = sphi 0, %s146
    %s161 = sphi 0, %s147
    %s165 = sphi 0, %s165
    %s167 = sphi 0, %s165
    %s168 = sphi 0, %s167
    %s182 = sphi 0, %s168
    %s190 = sphi 0, %s192
    %s193 = sphi 0, %s190
    %s194 = sphi 0, %s193
    %s210 = sphi 0, %s194
  $region4: #{focus_pallas.1} parent=0 // loop_header_branch
    %15 = sbr.rel (%p13) target = $region8
  $region5: #{focus_pallas.1} parent=0 // loop_body
    %s17 = ssub.s32 %s12, 1
    %s18 = ssub.s32 %s12, 2
    %s25 = sadd.s32 1, %s20
    %p26 = scmp.ge.s32.totalorder %s25, 1
    %s27 = scalar_select %p26, 0, %s25
    %s28 = sadd.s32 1, %s19
    %s29 = scalar_select %p26, %s28, %s19
    %p30 = scmp.ge.s32.totalorder %s29, 2
    %s31 = scalar_select %p30, 0, %s29
    %s32 = ssub.s32 %s19, %s31
    %s33 = ssub.s32 %s20, %s27
    %s34 = sor.u32 %s32, %s33
    %p35 = scmp.eq.s32.totalorder %s34, 0
    %s37 = sadd.s32 %s36, 1
    %s38 = scalar_select %p35, %s36, %s37
    %p41 = pneg %p35
    %p42 = scmp.eq.s32.totalorder %s12, 1
    %p43 = por %p41, %p42
    %p44 = scmp.ne.s32.totalorder %s36, %s39
    %p45 = scmp.eq.s32.totalorder %s12, 0
    %p46 = por %p44, %p45
    %p47 = scmp.ne.s32.totalorder %s36, %s39
    %p48 = scmp.eq.s32.totalorder %s17, 1
    %p49 = por %p47, %p48
    %p50 = scmp.ne.s32.totalorder %s39, %s40
    %p51 = scmp.eq.s32.totalorder %s17, 0
    %p52 = por %p50, %p51
    %p53 = scmp.ne.s32.totalorder %s39, %s40
    %p54 = scmp.eq.s32.totalorder %s18, 1
    %p55 = por %p53, %p54
    %p57 = scmp.ne.s32.totalorder %s40, %s56
    %p58 = scmp.eq.s32.totalorder %s18, 0
    %p59 = por %p57, %p58
    %s60 = ssub.s32 %s19, %s31
    %s61 = ssub.s32 %s20, %s27
    %s62 = sor.u32 %s60, %s61
    %p63 = scmp.eq.s32.totalorder %s62, 0
    %s65 = sadd.s32 %s64, 1
    %s66 = scalar_select %p63, %s64, %s65
    %p69 = pneg %p63
    %p70 = scmp.eq.s32.totalorder %s12, 1
    %p71 = por %p69, %p70
    %p72 = scmp.ne.s32.totalorder %s64, %s67
    %p73 = scmp.eq.s32.totalorder %s12, 0
    %p74 = por %p72, %p73
    %p75 = scmp.ne.s32.totalorder %s64, %s67
    %p76 = scmp.eq.s32.totalorder %s17, 1
    %p77 = por %p75, %p76
    %p78 = scmp.ne.s32.totalorder %s67, %s68
    %p79 = scmp.eq.s32.totalorder %s17, 0
    %p80 = por %p78, %p79
    %p81 = scmp.ne.s32.totalorder %s67, %s68
    %p82 = scmp.eq.s32.totalorder %s18, 1
    %p83 = por %p81, %p82
    %p85 = scmp.ne.s32.totalorder %s68, %s84
    %p86 = scmp.eq.s32.totalorder %s18, 0
    %p87 = por %p85, %p86
    %s88 = ssub.s32 %s19, %s31
    %s89 = ssub.s32 %s20, %s27
    %s90 = sor.u32 %s88, %s89
    %p91 = scmp.eq.s32.totalorder %s90, 0
    %s93 = sadd.s32 %s92, 1
    %s94 = scalar_select %p91, %s92, %s93
    %p97 = pneg %p91
    %p98 = scmp.eq.s32.totalorder %s12, 1
    %p99 = por %p97, %p98
    %p100 = scmp.ne.s32.totalorder %s92, %s95
    %p101 = scmp.eq.s32.totalorder %s12, 0
    %p102 = por %p100, %p101
    %p103 = scmp.ne.s32.totalorder %s92, %s95
    %p104 = scmp.eq.s32.totalorder %s17, 1
    %p105 = por %p103, %p104
    %p106 = scmp.ne.s32.totalorder %s95, %s96
    %p107 = scmp.eq.s32.totalorder %s17, 0
    %p108 = por %p106, %p107
    %p109 = scmp.ne.s32.totalorder %s95, %s96
    %p110 = scmp.eq.s32.totalorder %s18, 1
    %p111 = por %p109, %p110
    %p113 = scmp.ne.s32.totalorder %s96, %s112
    %p114 = scmp.eq.s32.totalorder %s18, 0
    %p115 = por %p113, %p114
    %s116 = ssub.s32 %s19, %s31
    %s117 = ssub.s32 %s20, %s27
    %s118 = sor.u32 %s116, %s117
    %p119 = scmp.eq.s32.totalorder %s118, 0
    %s121 = sadd.s32 %s120, 1
    %s122 = scalar_select %p119, %s120, %s121
    %p125 = pneg %p119
    %p126 = scmp.eq.s32.totalorder %s12, 1
    %p127 = por %p125, %p126
    %p128 = scmp.ne.s32.totalorder %s120, %s123
    %p129 = scmp.eq.s32.totalorder %s12, 0
    %p130 = por %p128, %p129
    %p131 = scmp.ne.s32.totalorder %s120, %s123
    %p132 = scmp.eq.s32.totalorder %s17, 1
    %p133 = por %p131, %p132
    %p134 = scmp.ne.s32.totalorder %s123, %s124
    %p135 = scmp.eq.s32.totalorder %s17, 0
    %p136 = por %p134, %p135
    %p137 = scmp.ne.s32.totalorder %s123, %s124
    %p138 = scmp.eq.s32.totalorder %s18, 1
    %p139 = por %p137, %p138
    %p141 = scmp.ne.s32.totalorder %s124, %s140
    %p142 = scmp.eq.s32.totalorder %s18, 0
    %p143 = por %p141, %p142
    %s145 = sadd.s32 %s144, 1
    %p148 = scmp.eq.s32.totalorder %s12, 1
    %p149 = scmp.ne.s32.totalorder %s144, %s146
    %p150 = scmp.eq.s32.totalorder %s12, 0
    %p151 = por %p149, %p150
    %p152 = scmp.ne.s32.totalorder %s144, %s146
    %p153 = scmp.eq.s32.totalorder %s17, 1
    %p154 = por %p152, %p153
    %p155 = scmp.ne.s32.totalorder %s146, %s147
    %p156 = scmp.eq.s32.totalorder %s17, 0
    %p157 = por %p155, %p156
    %p158 = scmp.ne.s32.totalorder %s146, %s147
    %p159 = scmp.eq.s32.totalorder %s18, 1
    %p160 = por %p158, %p159
    %p162 = scmp.ne.s32.totalorder %s147, %s161
    %p163 = scmp.eq.s32.totalorder %s18, 0
    %p164 = por %p162, %p163
    %s166 = sadd.s32 %s165, 1
    %p169 = scmp.eq.s32.totalorder %s12, 1
    %p170 = scmp.ne.s32.totalorder %s165, %s167
    %p171 = scmp.eq.s32.totalorder %s12, 0
    %p172 = por %p170, %p171
    %p173 = scmp.ne.s32.totalorder %s165, %s167
    %p174 = scmp.eq.s32.totalorder %s17, 1
    %p175 = por %p173, %p174
    %p176 = scmp.ne.s32.totalorder %s167, %s168
    %p177 = scmp.eq.s32.totalorder %s17, 0
    %p178 = por %p176, %p177
    %p179 = scmp.ne.s32.totalorder %s167, %s168
    %p180 = scmp.eq.s32.totalorder %s18, 1
    %p181 = por %p179, %p180
    %p183 = scmp.ne.s32.totalorder %s168, %s182
    %p184 = scmp.eq.s32.totalorder %s18, 0
    %p185 = por %p183, %p184
    %s186 = ssub.s32 %s19, %s31
    %s187 = ssub.s32 %s20, %s27
    %s188 = sor.u32 %s186, %s187
    %p189 = scmp.eq.s32.totalorder %s188, 0
    %s191 = sadd.s32 %s190, 1
    %s192 = scalar_select %p189, %s190, %s191
    %p195 = pneg %p189
    %p196 = scmp.eq.s32.totalorder %s12, 1
    %p197 = por %p195, %p196
    %p198 = scmp.ne.s32.totalorder %s190, %s193
    %p199 = scmp.eq.s32.totalorder %s12, 0
    %p200 = por %p198, %p199
    %p201 = scmp.ne.s32.totalorder %s190, %s193
    %p202 = scmp.eq.s32.totalorder %s17, 1
    %p203 = por %p201, %p202
    %p204 = scmp.ne.s32.totalorder %s193, %s194
    %p205 = scmp.eq.s32.totalorder %s17, 0
    %p206 = por %p204, %p205
    %p207 = scmp.ne.s32.totalorder %s193, %s194
    %p208 = scmp.eq.s32.totalorder %s18, 1
    %p209 = por %p207, %p208
    %p211 = scmp.ne.s32.totalorder %s194, %s210
    %p212 = scmp.eq.s32.totalorder %s18, 0
    %p213 = por %p211, %p212
    %p214 = scmp.le.s32.totalorder 1, %s12
    %p215 = scmp.lt.s32.totalorder %s12, 3
    %p216 = pnand %p214, %p215
    %p217 = pneg %p216
    // Predicated region
    $region9: #{focus_pallas.1} parent=5 // pred_check
      _
    $region10: #{focus_pallas.1} parent=5 // pred_check_branch
      %219 = sbr.rel (%p216) target = $region12
    $region11: #{focus_pallas.1} parent=5 // pred_region
      %s220 = ssub.s32 %s12, 1
      // Predicated region
      $region13: #{focus_pallas.1} parent=11 // pred_check
        %p221 = pneg %p157
      $region14: #{focus_pallas.1} parent=11 // pred_check_branch
        %223 = sbr.rel (%p221) target = $region16
      $region15: #{focus_pallas.1} parent=11 // pred_region
        _
      $region16: #{focus_pallas.1} parent=11 // pred_fallthru
        _
      // Predicated region
      $region17: #{focus_pallas.1} parent=11 // pred_check
        %p224 = pneg %p178
      $region18: #{focus_pallas.1} parent=11 // pred_check_branch
        %226 = sbr.rel (%p224) target = $region20
      $region19: #{focus_pallas.1} parent=11 // pred_region
        _
      $region20: #{focus_pallas.1} parent=11 // pred_fallthru
        _
    $region12: #{focus_pallas.1} parent=5 // pred_fallthru
      _
    %p227 = scmp.lt.s32.totalorder %s12, 2
    // Predicated region
    $region21: #{focus_pallas.1} parent=5 // pred_check
      %p228 = pneg %p227
    $region22: #{focus_pallas.1} parent=5 // pred_check_branch
      %230 = sbr.rel (%p228) target = $region24
    $region23: #{focus_pallas.1} parent=5 // pred_region
      // Predicated region
      $region25: #{focus_pallas.1} parent=23 // pred_check
        %p231 = pneg %p46
      $region26: #{focus_pallas.1} parent=23 // pred_check_branch
        %233 = sbr.rel (%p231) target = $region28
      $region27: #{focus_pallas.1} parent=23 // pred_region
        %p234 = scmp.lt.s32.totalorder %s19, 1
        %s235 = scalar_select %p234, %s19, 1
        %p236 = scmp.lt.s32.totalorder %s20, 0
        %s237 = scalar_select %p236, %s20, 0
        %s238 = sadd.s32 %s237, %s235
        %s239 = smul.addr %s238, 4
        %s240 = scalar_lea.vmem %s0, %s239
      $region28: #{focus_pallas.1} parent=23 // pred_fallthru
        _
      // Predicated region
      $region29: #{focus_pallas.1} parent=23 // pred_check
        %p241 = pneg %p74
      $region30: #{focus_pallas.1} parent=23 // pred_check_branch
        %243 = sbr.rel (%p241) target = $region32
      $region31: #{focus_pallas.1} parent=23 // pred_region
        %p244 = scmp.lt.s32.totalorder %s19, 1
        %s245 = scalar_select %p244, %s19, 1
        %p246 = scmp.lt.s32.totalorder %s20, 0
        %s247 = scalar_select %p246, %s20, 0
        %s248 = sadd.s32 %s247, %s245
        %s249 = smul.addr %s248, 4
        %s250 = scalar_lea.vmem %s1, %s249
      $region32: #{focus_pallas.1} parent=23 // pred_fallthru
        _
      // Predicated region
      $region33: #{focus_pallas.1} parent=23 // pred_check
        %p251 = pneg %p102
      $region34: #{focus_pallas.1} parent=23 // pred_check_branch
        %253 = sbr.rel (%p251) target = $region36
      $region35: #{focus_pallas.1} parent=23 // pred_region
        %p254 = scmp.lt.s32.totalorder %s19, 1
        %s255 = scalar_select %p254, %s19, 1
        %p256 = scmp.lt.s32.totalorder %s20, 0
        %s257 = scalar_select %p256, %s20, 0
        %s258 = sadd.s32 %s257, %s255
        %s259 = smul.addr %s258, 4
        %s260 = scalar_lea.vmem %s2, %s259
      $region36: #{focus_pallas.1} parent=23 // pred_fallthru
        _
      // Predicated region
      $region37: #{focus_pallas.1} parent=23 // pred_check
        %p261 = pneg %p130
      $region38: #{focus_pallas.1} parent=23 // pred_check_branch
        %263 = sbr.rel (%p261) target = $region40
      $region39: #{focus_pallas.1} parent=23 // pred_region
        %p264 = scmp.lt.s32.totalorder %s19, 1
        %s265 = scalar_select %p264, %s19, 1
        %p266 = scmp.lt.s32.totalorder %s20, 0
        %s267 = scalar_select %p266, %s20, 0
        %s268 = sadd.s32 %s267, %s265
        %s269 = smul.addr %s268, 4
        %s270 = scalar_lea.vmem %s3, %s269
      $region40: #{focus_pallas.1} parent=23 // pred_fallthru
        _
    $region24: #{focus_pallas.1} parent=5 // pred_fallthru
      _
    %p271 = scmp.le.s32.totalorder 1, %s12
    %p272 = scmp.lt.s32.totalorder %s12, 3
    %p273 = pnand %p271, %p272
    %p274 = pneg %p273
    // Predicated region
    $region41: #{focus_pallas.1} parent=5 // pred_check
      _
    $region42: #{focus_pallas.1} parent=5 // pred_check_branch
      %276 = sbr.rel (%p273) target = $region44
    $region43: #{focus_pallas.1} parent=5 // pred_region
      %s277 = ssub.s32 %s12, 1
      %p278 = scmp.lt.s32.totalorder %s21, 1
      %s279 = scalar_select %p278, %s21, 1
      %p280 = scmp.lt.s32.totalorder %s22, 0
      %s281 = scalar_select %p280, %s22, 0
      %s282 = sadd.s32 %s281, %s279
      %s283 = smul.addr %s282, 4
      %s284 = scalar_lea.vmem %s0, %s283
      %p285 = pneg %p52
      %p286 = pneg %p49
      %p287 = scmp.lt.s32.totalorder %s21, 1
      %s288 = scalar_select %p287, %s21, 1
      %p289 = scmp.lt.s32.totalorder %s22, 0
      %s290 = scalar_select %p289, %s22, 0
      %s291 = sadd.s32 %s290, %s288
      %s292 = smul.addr %s291, 4
      %s293 = scalar_lea.vmem %s1, %s292
      %p294 = pneg %p80
      %p295 = pneg %p77
      %p296 = scmp.lt.s32.totalorder %s21, 1
      %s297 = scalar_select %p296, %s21, 1
      %p298 = scmp.lt.s32.totalorder %s22, 0
      %s299 = scalar_select %p298, %s22, 0
      %s300 = sadd.s32 %s299, %s297
      %s301 = smul.addr %s300, 4
      %s302 = scalar_lea.vmem %s2, %s301
      %p303 = pneg %p108
      %p304 = pneg %p105
      %p305 = scmp.lt.s32.totalorder %s21, 1
      %s306 = scalar_select %p305, %s21, 1
      %p307 = scmp.lt.s32.totalorder %s22, 0
      %s308 = scalar_select %p307, %s22, 0
      %s309 = sadd.s32 %s308, %s306
      %s310 = smul.addr %s309, 4
      %s311 = scalar_lea.vmem %s3, %s310
      %p312 = pneg %p136
      %p313 = pneg %p133
      %p314 = pneg %p157
      %p315 = pneg %p154
      %p316 = pneg %p178
      %p317 = pneg %p175
      %p318 = pneg %p206
      %p319 = pneg %p203
      %p320 = scmp.lt.s32.totalorder %s21, 1
      %s321 = scalar_select %p320, %s21, 1
      %p322 = scmp.lt.s32.totalorder %s22, 0
      %s323 = scalar_select %p322, %s22, 0
      %s324 = sadd.s32 %s323, %s321
      %s325 = smul.addr %s324, 8
      %s326 = scalar_lea.vmem %s6, %s325
      %p327 = scmp.lt.s32.totalorder %s21, 1
      %s328 = scalar_select %p327, %s21, 1
      %p329 = scmp.lt.s32.totalorder %s22, 0
      %s330 = scalar_select %p329, %s22, 0
      %s331 = sadd.s32 %s330, %s328
      %s332 = smul.addr %s331, 4
      %s333 = scalar_lea.vmem %s0, %s332
      %p334 = scmp.lt.s32.totalorder %s21, 1
      %s335 = scalar_select %p334, %s21, 1
      %p336 = scmp.lt.s32.totalorder %s22, 0
      %s337 = scalar_select %p336, %s22, 0
      %s338 = sadd.s32 %s337, %s335
      %s339 = smul.addr %s338, 4
      %s340 = scalar_lea.vmem %s1, %s339
      %p341 = scmp.lt.s32.totalorder %s21, 1
      %s342 = scalar_select %p341, %s21, 1
      %p343 = scmp.lt.s32.totalorder %s22, 0
      %s344 = scalar_select %p343, %s22, 0
      %s345 = sadd.s32 %s344, %s342
      %s346 = smul.addr %s345, 4
      %s347 = scalar_lea.vmem %s2, %s346
      %p348 = scmp.lt.s32.totalorder %s21, 1
      %s349 = scalar_select %p348, %s21, 1
      %p350 = scmp.lt.s32.totalorder %s22, 0
      %s351 = scalar_select %p350, %s22, 0
      %s352 = sadd.s32 %s351, %s349
      %s353 = smul.addr %s352, 4
      %s354 = scalar_lea.vmem %s3, %s353
      %p355 = scmp.lt.s32.totalorder %s21, 1
      %s356 = scalar_select %p355, %s21, 1
      %p357 = scmp.lt.s32.totalorder %s22, 0
      %s358 = scalar_select %p357, %s22, 0
      %s359 = sadd.s32 %s358, %s356
      %s360 = smul.addr %s359, 8
      %s361 = scalar_lea.vmem %s6, %s360
      %v362 = vld [vmem:[%s4] sm:$0xff]
      %v363 = vld [vmem:[%s333] sm:$0xf]
      %s364 = scalar_lea.vmem %s4, 8
      %v365 = vld [vmem:[%s364] sm:$0xff]
      %v366 = vld [vmem:[%s340] sm:$0xf]
      %vm367 = vcmask 31744
      %v369 = vsel %vm367, %v365, 0
      %vm371 = vcmask 1043456
      %v373 = vsel %vm371, %v366, 0
      %375 = vmatpush.msra.mxu0 0.0
      %376 = vmatpush.msra.mxu0 0.0
      %377 = vmatpush.msra.mxu0 0.0
      %378 = vmatpush.msra.mxu0 0.0
      %379 = vmatpush.msra.mxu0 0.0
      %380 = vmatpush.msra.mxu0 0.0
      %381 = vmatpush.msra.mxu0 0.0
      %382 = vmatpush.msra.mxu0 0.0
      %383 = vmatpush.msra.mxu0 0.0
      %384 = vmatpush.msra.mxu0 0.0
      %385 = vmatpush.msra.mxu0 0.0
      %386 = vmatpush.msra.mxu0 0.0
      %387 = vmatpush.msra.mxu0 0.0
      %388 = vmatpush.msra.mxu0 0.0
      %389 = vmatpush.msra.mxu0 0.0
      %390 = vmatpush.msra.mxu0 %v373
      %391 = vmatmul.f32.gmra.mxu0 %v369
      %v392 = vpop.f32.mrf.mxu0
      %v393 = vadd.f32 0.0, %v392
      %394 = vdwg.mxu0
      %v396 = vsel %vm367, %v362, 0
      %v399 = vsel %vm371, %v363, 0
      %401 = vmatpush.msra.mxu0 0.0
      %402 = vmatpush.msra.mxu0 0.0
      %403 = vmatpush.msra.mxu0 0.0
      %404 = vmatpush.msra.mxu0 0.0
      %405 = vmatpush.msra.mxu0 0.0
      %406 = vmatpush.msra.mxu0 0.0
      %407 = vmatpush.msra.mxu0 0.0
      %408 = vmatpush.msra.mxu0 0.0
      %409 = vmatpush.msra.mxu0 0.0
      %410 = vmatpush.msra.mxu0 0.0
      %411 = vmatpush.msra.mxu0 0.0
      %412 = vmatpush.msra.mxu0 0.0
      %413 = vmatpush.msra.mxu0 0.0
      %414 = vmatpush.msra.mxu0 0.0
      %415 = vmatpush.msra.mxu0 0.0
      %416 = vmatpush.msra.mxu0 %v399
      %417 = vmatmul.f32.gmra.mxu0 %v396
      %v418 = vpop.f32.mrf.mxu0
      %v419 = vadd.f32 %v393, %v418
      %420 = vdwg.mxu0
      %s421 = scalar_lea.vmem %s4, 16
      %v422 = vld [vmem:[%s421] sm:$0xff]
      %v423 = vld [vmem:[%s347] sm:$0xf]
      %v425 = vsel %vm367, %v422, 0
      %v428 = vsel %vm371, %v423, 0
      %430 = vmatpush.msra.mxu0 0.0
      %431 = vmatpush.msra.mxu0 0.0
      %432 = vmatpush.msra.mxu0 0.0
      %433 = vmatpush.msra.mxu0 0.0
      %434 = vmatpush.msra.mxu0 0.0
      %435 = vmatpush.msra.mxu0 0.0
      %436 = vmatpush.msra.mxu0 0.0
      %437 = vmatpush.msra.mxu0 0.0
      %438 = vmatpush.msra.mxu0 0.0
      %439 = vmatpush.msra.mxu0 0.0
      %440 = vmatpush.msra.mxu0 0.0
      %441 = vmatpush.msra.mxu0 0.0
      %442 = vmatpush.msra.mxu0 0.0
      %443 = vmatpush.msra.mxu0 0.0
      %444 = vmatpush.msra.mxu0 0.0
      %445 = vmatpush.msra.mxu0 %v428
      %446 = vmatmul.f32.gmra.mxu0 %v425
      %v447 = vpop.f32.mrf.mxu0
      %v448 = vadd.f32 0.0, %v447
      %449 = vdwg.mxu0
      %v450 = vadd.f32 %v419, %v448
      %s451 = scalar_lea.vmem %s4, 24
      %v452 = vld [vmem:[%s451] sm:$0xff]
      %v453 = vld [vmem:[%s354] sm:$0xf]
      %v455 = vsel %vm367, %v452, 0
      %v458 = vsel %vm371, %v453, 0
      %460 = vmatpush.msra.mxu0 0.0
      %461 = vmatpush.msra.mxu0 0.0
      %462 = vmatpush.msra.mxu0 0.0
      %463 = vmatpush.msra.mxu0 0.0
      %464 = vmatpush.msra.mxu0 0.0
      %465 = vmatpush.msra.mxu0 0.0
      %466 = vmatpush.msra.mxu0 0.0
      %467 = vmatpush.msra.mxu0 0.0
      %468 = vmatpush.msra.mxu0 0.0
      %469 = vmatpush.msra.mxu0 0.0
      %470 = vmatpush.msra.mxu0 0.0
      %471 = vmatpush.msra.mxu0 0.0
      %472 = vmatpush.msra.mxu0 0.0
      %473 = vmatpush.msra.mxu0 0.0
      %474 = vmatpush.msra.mxu0 0.0
      %475 = vmatpush.msra.mxu0 %v458
      %476 = vmatmul.f32.gmra.mxu0 %v455
      %v477 = vpop.f32.mrf.mxu0
      %v478 = vadd.f32 0.0, %v477
      %479 = vdwg.mxu0
      %v480 = vadd.f32 %v450, %v478
      %v481 = vld [vmem:[%s5] sm:$0xff]
      %483 = vset.pattern.permute.xlu0 0
      %484 = vperm.xlu0 %483, %v481
      %v485 = vpop.permute.xlu0 %484
      %v487 = vadd.f32 %v480, %v485
      %v488 = vxor.u32 %v487, 2147483648
      %v489 = vmul.f32 %v488, 1.442695
      %v490 = vpow.pop %v489
      %v491 = vadd.f32 %v490, 1.0
      %v492 = vrcp.pop %v491
      %v493 = vmul.f32 %v491, %v492
      %v494 = vsub.f32 1.0, %v493
      %v495 = vmul.f32 %v492, %v494
      %v496 = vadd.f32 %v492, %v495
      %vm497 = vweird.f32 %v491
      %vm498 = vweird.f32 %v492
      %vm499 = vmor %vm497, %vm498
      %v500 = vsel %vm499, %v492, %v496
      %v501 = vand.u32 2147483647, %v491
      %vm502 = vcmp.eq.f32.partialorder %v501, 8.507059e+37
      %v503 = vand.u32 %v491, 2147483648
      %v504 = vor.u32 1.1754944e-38, %v503
      %v505 = vsel %vm502, %v504, %v500
      %v506 = vmul.f32 1.0, %v505
      %v507 = vmul.f32 %v487, %v506
      %vm508 = vcmask 523264
      %509 = vst.msk [vmem:[%s361] sm:$0xff] %vm508, %v507
      %p510 = scmp.lt.s32.totalorder %s21, 1
      %s511 = scalar_select %p510, %s21, 1
      %p512 = scmp.lt.s32.totalorder %s22, 0
      %s513 = scalar_select %p512, %s22, 0
      %s514 = sadd.s32 %s513, %s511
      %s515 = smul.addr %s514, 8
      %s516 = scalar_lea.vmem %s6, %s515
      // Predicated region
      $region45: #{focus_pallas.1} parent=43 // pred_check
        %p517 = pneg %p203
      $region46: #{focus_pallas.1} parent=43 // pred_check_branch
        %519 = sbr.rel (%p517) target = $region48
      $region47: #{focus_pallas.1} parent=43 // pred_region
        _
      $region48: #{focus_pallas.1} parent=43 // pred_fallthru
        _
    $region44: #{focus_pallas.1} parent=5 // pred_fallthru
      _
    %p520 = scmp.le.s32.totalorder 2, %s12
    // Predicated region
    $region49: #{focus_pallas.1} parent=5 // pred_check
      %p521 = pneg %p520
    $region50: #{focus_pallas.1} parent=5 // pred_check_branch
      %523 = sbr.rel (%p521) target = $region52
    $region51: #{focus_pallas.1} parent=5 // pred_region
      %s524 = ssub.s32 %s12, 2
      // Predicated region
      $region53: #{focus_pallas.1} parent=51 // pred_check
        %p525 = pneg %p209
      $region54: #{focus_pallas.1} parent=51 // pred_check_branch
        %527 = sbr.rel (%p525) target = $region56
      $region55: #{focus_pallas.1} parent=51 // pred_region
        %p528 = scmp.lt.s32.totalorder %s23, 1
        %s529 = scalar_select %p528, %s23, 1
        %p530 = scmp.lt.s32.totalorder %s24, 0
        %s531 = scalar_select %p530, %s24, 0
        %s532 = sadd.s32 %s531, %s529
        %s533 = smul.addr %s532, 8
        %s534 = scalar_lea.vmem %s6, %s533
      $region56: #{focus_pallas.1} parent=51 // pred_fallthru
        _
    $region52: #{focus_pallas.1} parent=5 // pred_fallthru
      _
  $region6: #{focus_pallas.1} parent=0 // loop_footer
    %s16 = sadd.s32 1, %s12
  $region7: #{focus_pallas.1} parent=0 // loop_footer_branch
    %11 = sbr.rel target = $region3
  $region8: #{focus_pallas.1} parent=0 // loop_exit
    _

</llo_original>
